<compile_context>
chip_gen: v6e
topology: v6e:2x2x1
jax: 0.10.0
libtpu: 0.0.40
codegen_flags: <defaults>
</compile_context>

<pallas_src>
import math

import jax
import jax.numpy as jnp
from jax.experimental import pallas as pl
from jax.experimental.pallas import tpu as pltpu


# ----------------------------------------------------------------------------
# In-kernel helpers
# ----------------------------------------------------------------------------
def _mlp(h, w_refs, num_layers):
    """h: [rows, in] f32. Weights are bf16 (host pre-cast), biases f32.
    ReLU between linears, none after the last. Matmuls run on the MXU in bf16 with
    f32 accumulation; all elementwise math stays f32 on the VPU."""
    for i in range(num_layers):
        w = w_refs[2 * i][...]
        b = w_refs[2 * i + 1][...]
        h = jnp.dot(h.astype(jnp.bfloat16), w,
                    preferred_element_type=jnp.float32) + b
        if i < num_layers - 1:
            h = jnp.maximum(h, 0.0)
    return h


def _softmax_hard_packed(z2, num_experts):
    """z2: [rows, 2E] f32 scaled logits whose two lane-halves are identical copies.
    Returns [rows, 2E]: first E lanes = softmax over experts, last E lanes = hard
    one-hot (first-index tie-breaking on the logits, matching torch.max)."""
    rows, two_e = z2.shape
    m = jnp.max(z2, axis=-1, keepdims=True)            # == max over the E unique logits
    e2 = jnp.exp(z2 - m)
    denom = jnp.sum(e2, axis=-1, keepdims=True)        # == 2 * sum over E unique logits
    sm2 = e2 * (2.0 * pl.reciprocal(denom, approx=True))
    idx = jax.lax.broadcasted_iota(jnp.int32, (rows, two_e), 1)
    col = jnp.where(idx >= num_experts, idx - num_experts, idx)
    sel = jnp.where(z2 == m, col, num_experts)
    amax = jnp.min(sel, axis=-1, keepdims=True)        # first expert achieving the max
    hard2 = jnp.where(col == amax, 1.0, 0.0)
    return jnp.where(idx < num_experts, sm2, hard2)


# ----------------------------------------------------------------------------
# Kernels
# ----------------------------------------------------------------------------
def _make_mean_kernel(num_layers, num_experts, seq_len):
    """experts_in_gates=False: grid = (batch_tiles, seq_tiles); seq is a reduction
    axis accumulating the mean into a VMEM scratch; MLP + softmax on the last step."""
    inv_seq = 1.0 / float(seq_len)

    def kernel(*refs):
        x_ref = refs[0]                           # VMEM [TB, TS, D]
        w_refs = refs[1:1 + 2 * num_layers]       # resident weights / biases
        out_ref = refs[1 + 2 * num_layers]        # VMEM [TB, 2E]
        acc_ref = refs[2 + 2 * num_layers]        # VMEM scratch [TB, D] f32

        s = pl.program_id(1)

        @pl.when(s == 0)
        def _init():
            acc_ref[...] = jnp.zeros_like(acc_ref)

        acc_ref[...] += jnp.sum(x_ref[...].astype(jnp.float32), axis=1)

        @pl.when(s == pl.num_programs(1) - 1)
        def _finalize():
            h = acc_ref[...] * inv_seq                       # mean over seq
            z2 = _mlp(h, w_refs, num_layers)                 # [TB, 2E] scaled logits
            out_ref[...] = _softmax_hard_packed(z2, num_experts)

    return kernel


def _make_rowwise_kernel(num_layers, num_experts):
    """experts_in_gates=True: grid = (batch_tiles,); x is pre-flattened to [B, E*D]
    and the weights are block-diagonal, so no in-kernel reshape is needed."""
    def kernel(*refs):
        x_ref = refs[0]                           # VMEM [TB, E*D]
        w_refs = refs[1:1 + 2 * num_layers]       # resident block-diagonal weights
        out_ref = refs[1 + 2 * num_layers]        # VMEM [TB, 2E]

        h = x_ref[...].astype(jnp.float32)
        z2 = _mlp(h, w_refs, num_layers)                     # [TB, 2E] scaled logits
        out_ref[...] = _softmax_hard_packed(z2, num_experts)

    return kernel


# ----------------------------------------------------------------------------
# Host-side parameter preparation (free layout plumbing)
# ----------------------------------------------------------------------------
def _prep_params_mean(params, inv_temp):
    """bf16 weights / f32 biases; final-layer columns duplicated to 2E (packed
    softmax|hard output) and pre-scaled by 1/temperature."""
    last = len(params) - 1
    prepped = []
    for i, (w, b) in enumerate(params):
        if i == last:
            w = jnp.concatenate([w, w], axis=1) * inv_temp
            b = jnp.concatenate([b, b], axis=1) * inv_temp
        prepped.append((w.astype(jnp.bfloat16), b.astype(jnp.float32)))
    return prepped


def _prep_params_experts(params, num_experts, inv_temp):
    """Per-expert-row MLP expressed as block-diagonal weights over the flattened
    [B, E*D] input (built once on the host): removes in-kernel reshapes and the
    N=1 final matmul. Last layer: duplicated to 2E columns and scaled by 1/T."""
    eye = jnp.eye(num_experts, dtype=jnp.float32)
    last = len(params) - 1
    prepped = []
    for i, (w, b) in enumerate(params):
        w_big = jnp.kron(eye, w)                         # [E*in, E*out], W on the diagonal
        if i == last:                                    # out == 1 per expert block
            w_big = jnp.concatenate([w_big, w_big], axis=1) * inv_temp   # -> [E*H, 2E]
            b_big = jnp.tile(b, (1, 2 * num_experts)) * inv_temp
        else:
            b_big = jnp.tile(b, (1, num_experts))
        prepped.append((w_big.astype(jnp.bfloat16), b_big.astype(jnp.float32)))
    return prepped


def _pick_tile(n, cap):
    """Largest power-of-two tile (>=8, <=cap) dividing n; else the full extent
    (a full-extent block is always a legal BlockSpec dim)."""
    c = cap
    while c >= 8:
        if c <= n and n % c == 0:
            return c
        c //= 2
    return n


_VMEM_LIMIT_BYTES = 32 * 1024 * 1024   # explicit scoped-VMEM budget; safe on v5e/v6e/v7x


# ----------------------------------------------------------------------------
# Forward wrapper
# ----------------------------------------------------------------------------
def softmax_net_forward(x_z, params, temperature, *, experts_in_gates,
                        block_b=None, block_s=None):
    """params: list of (W[in, out], b[1, out]) f32 tuples (PyTorch Linear transposed).
    Returns (softmax_y, y_hard), each of shape [batch, num_experts, 1]."""
    num_layers = len(params)
    inv_temp = 1.0 / float(temperature)

    if experts_in_gates:
        batch, num_experts, dim = x_z.shape
        x_in = x_z.reshape(batch, num_experts * dim)         # free host-side reshape
        prepped = _prep_params_experts(params, num_experts, inv_temp)
        tb = block_b if block_b is not None else _pick_tile(batch, 512)
        if batch % tb != 0:
            tb = batch
        grid = (batch // tb,)
        kernel = _make_rowwise_kernel(num_layers, num_experts)

        in_specs = [pl.BlockSpec((tb, num_experts * dim), lambda i: (i, 0))]
        for w, bvec in prepped:
            in_specs.append(pl.BlockSpec(w.shape, lambda i: (0, 0)))
            in_specs.append(pl.BlockSpec(bvec.shape, lambda i: (0, 0)))
        out_specs = pl.BlockSpec((tb, 2 * num_experts), lambda i: (i, 0))
        scratch_shapes = []
        dim_semantics = ("parallel",)
    else:
        batch, seq, dim = x_z.shape
        num_experts = params[-1][0].shape[1]
        x_in = x_z
        prepped = _prep_params_mean(params, inv_temp)
        tb = block_b if block_b is not None else _pick_tile(batch, 256)
        ts = block_s if block_s is not None else _pick_tile(seq, 128)
        if batch % tb != 0:
            tb = batch
        if seq % ts != 0:
            ts = seq
        grid = (batch // tb, seq // ts)
        kernel = _make_mean_kernel(num_layers, num_experts, seq)

        in_specs = [pl.BlockSpec((tb, ts, dim), lambda i, j: (i, j, 0))]
        for w, bvec in prepped:
            in_specs.append(pl.BlockSpec(w.shape, lambda i, j: (0, 0)))
            in_specs.append(pl.BlockSpec(bvec.shape, lambda i, j: (0, 0)))
        out_specs = pl.BlockSpec((tb, 2 * num_experts), lambda i, j: (i, 0))
        scratch_shapes = [pltpu.VMEM((tb, dim), jnp.float32)]
        dim_semantics = ("parallel", "arbitrary")

    flat_args = [x_in]
    for w, bvec in prepped:
        flat_args += [w, bvec]

    packed = pl.pallas_call(
        kernel,
        out_shape=jax.ShapeDtypeStruct((batch, 2 * num_experts), jnp.float32),
        grid=grid,
        in_specs=in_specs,
        out_specs=out_specs,
        scratch_shapes=scratch_shapes,
        compiler_params=pltpu.CompilerParams(
            dimension_semantics=dim_semantics,
            vmem_limit_bytes=_VMEM_LIMIT_BYTES),
    )(*flat_args)

    sm = packed[:, :num_experts]
    hard = packed[:, num_experts:]
    return sm[..., None], hard[..., None]


# ----------------------------------------------------------------------------
# Init / reference / checks
# ----------------------------------------------------------------------------
def init_params(key, dim_xz, dim_logit_h, num_logit_layers, num_experts,
                experts_in_gates):
    """Deterministic PyTorch-Linear-style init. Returns list of (W[in,out], b[1,out])."""
    out_last = 1 if experts_in_gates else num_experts
    dims = [dim_xz] + [dim_logit_h] * (num_logit_layers + 1) + [out_last]
    params = []
    for i in range(len(dims) - 1):
        fan_in, fan_out = dims[i], dims[i + 1]
        key, kw, kb = jax.random.split(key, 3)
        bound = 1.0 / math.sqrt(fan_in)
        w = jax.random.uniform(kw, (fan_in, fan_out), jnp.float32, -bound, bound)
        b = jax.random.uniform(kb, (1, fan_out), jnp.float32, -bound, bound)
        params.append((w, b))
    return params


def _reference(x_z, params, temperature, experts_in_gates):
    """Pure-JAX f32 reference."""
    h = x_z if experts_in_gates else jnp.mean(x_z, axis=-2)
    for i, (w, b) in enumerate(params):
        h = h @ w + b
        if i < len(params) - 1:
            h = jnp.maximum(h, 0.0)
    logits = h[..., 0] if experts_in_gates else h
    sm = jax.nn.softmax(logits / temperature, axis=-1)
    hard = jax.nn.one_hot(jnp.argmax(sm, axis=-1), sm.shape[-1], dtype=jnp.float32)
    return sm[..., None], hard[..., None]


def _check(sm_p, hard_p, sm_ref, hard_ref, shape):
    assert sm_p.shape == shape and hard_p.shape == shape
    # bf16 matmuls + approx reciprocal -> loose tolerance on the probabilities.
    err = float(jnp.max(jnp.abs(sm_p - sm_ref)))
    assert jnp.allclose(sm_p, sm_ref, atol=3e-2), f"softmax mismatch, max err {err}"
    sm2 = jnp.squeeze(sm_p, -1)
    hard2 = jnp.squeeze(hard_p, -1)
    # hard is a valid one-hot located at the argmax of the kernel's own softmax.
    assert bool(jnp.all(jnp.sum(hard2, axis=-1) == 1.0))
    am = jnp.argmax(sm2, axis=-1)
    assert bool(jnp.all(jnp.take_along_axis(hard2, am[:, None], axis=-1) == 1.0))
    # ... and matches the f32 reference wherever the reference argmax is unambiguous.
    ref2 = jnp.squeeze(sm_ref, -1)
    srt = jnp.sort(ref2, axis=-1)
    clear = (srt[:, -1] - srt[:, -2]) > 5e-2
    agree = jnp.all(hard2 == jnp.squeeze(hard_ref, -1), axis=-1)
    assert bool(jnp.all(jnp.where(clear, agree, True)))


if __name__ == "__main__":
    key = jax.random.PRNGKey(0)
    dim_xz, dim_logit_h, num_logit_layers, num_experts = 32, 32, 1, 4
    batch, seq = 16, 16
    temperature = 0.5

    k_p, k_x, k_p2, k_x2 = jax.random.split(key, 4)

    # --- experts_in_gates = False: x_z is [batch, seq, dim_xz] ---
    params_f = init_params(k_p, dim_xz, dim_logit_h, num_logit_layers,
                           num_experts, experts_in_gates=False)
    x_f = jax.random.normal(k_x, (batch, seq, dim_xz), jnp.float32)
    sm_f, hard_f = softmax_net_forward(x_f, params_f, temperature,
                                       experts_in_gates=False,
                                       block_b=8, block_s=8)   # exercise the 2x2 grid
    jax.block_until_ready((sm_f, hard_f))
    ref_sm_f, ref_hard_f = _reference(x_f, params_f, temperature, False)
    _check(sm_f, hard_f, ref_sm_f, ref_hard_f, (batch, num_experts, 1))

    # --- experts_in_gates = True: x_z is [batch, num_experts, dim_xz] ---
    params_t = init_params(k_p2, dim_xz, dim_logit_h, num_logit_layers,
                           num_experts, experts_in_gates=True)
    x_t = jax.random.normal(k_x2, (batch, num_experts, dim_xz), jnp.float32)
    sm_t, hard_t = softmax_net_forward(x_t, params_t, temperature,
                                       experts_in_gates=True,
                                       block_b=8)              # exercise a 2-step grid
    jax.block_until_ready((sm_t, hard_t))
    ref_sm_t, ref_hard_t = _reference(x_t, params_t, temperature, True)
    _check(sm_t, hard_t, ref_sm_t, ref_hard_t, (batch, num_experts, 1))

    print("KERNEL_OK")
</pallas_src>

<mosaic_0001>
module attributes {stable_mosaic.version = 11 : i64} {
  func.func @kernel(%arg0: i32, %arg1: i32, %arg2: memref<8x8x32xf32, #tpu.memory_space<vmem>>, %arg3: memref<32x32xbf16, #tpu.memory_space<vmem>>, %arg4: memref<1x32xf32, #tpu.memory_space<vmem>>, %arg5: memref<32x32xbf16, #tpu.memory_space<vmem>>, %arg6: memref<1x32xf32, #tpu.memory_space<vmem>>, %arg7: memref<32x8xbf16, #tpu.memory_space<vmem>>, %arg8: memref<1x8xf32, #tpu.memory_space<vmem>>, %arg9: memref<8x8xf32, #tpu.memory_space<vmem>>, %arg10: memref<8x32xf32, #tpu.memory_space<vmem>>) attributes {dimension_semantics = [#tpu.dimension_semantics<parallel>, #tpu.dimension_semantics<arbitrary>], iteration_bounds = array<i64: 2, 2>, scalar_prefetch = 0 : i64, scratch_operands = 1 : i64, tpu.core_type = #tpu.core_type<tc>, window_params = [{transform_indices = @transform_0, window_bounds = array<i64: 8, 8, 32>}, {pipeline_mode = #tpu.pipeline_mode<synchronous>, transform_indices = @transform_1, window_bounds = array<i64: 32, 32>}, {pipeline_mode = #tpu.pipeline_mode<synchronous>, transform_indices = @transform_2, window_bounds = array<i64: 1, 32>}, {pipeline_mode = #tpu.pipeline_mode<synchronous>, transform_indices = @transform_3, window_bounds = array<i64: 32, 32>}, {pipeline_mode = #tpu.pipeline_mode<synchronous>, transform_indices = @transform_4, window_bounds = array<i64: 1, 32>}, {pipeline_mode = #tpu.pipeline_mode<synchronous>, transform_indices = @transform_5, window_bounds = array<i64: 32, 8>}, {pipeline_mode = #tpu.pipeline_mode<synchronous>, transform_indices = @transform_6, window_bounds = array<i64: 1, 8>}, {transform_indices = @transform_7, window_bounds = array<i64: 8, 8>}]} {
    %c0_i32 = arith.constant 0 : i32
    %0 = arith.cmpi eq, %arg1, %c0_i32 : i32
    %1 = arith.extui %0 : i1 to i32
    %c0_i32_0 = arith.constant 0 : i32
    %2 = arith.cmpi ne, %1, %c0_i32_0 : i32
    scf.if %2 {
      %cst_8 = arith.constant 0.000000e+00 : f32
      %11 = vector.broadcast %cst_8 : f32 to vector<8x32xf32>
      %c0_9 = arith.constant 0 : index
      %c0_10 = arith.constant 0 : index
      %12 = vector.load %arg10[%c0_9, %c0_10] : memref<8x32xf32, #tpu.memory_space<vmem>>, vector<8x32xf32>
      tpu.vector_store %arg10[%c0_9, %c0_10], %11 {strides = array<i32>} : memref<8x32xf32, #tpu.memory_space<vmem>>, vector<8x32xf32>,
    } else {
    }
    %c0 = arith.constant 0 : index
    %c0_1 = arith.constant 0 : index
    %3 = vector.load %arg10[%c0, %c0_1] : memref<8x32xf32, #tpu.memory_space<vmem>>, vector<8x32xf32>
    %c0_2 = arith.constant 0 : index
    %c0_3 = arith.constant 0 : index
    %c0_4 = arith.constant 0 : index
    %4 = vector.load %arg2[%c0_2, %c0_3, %c0_4] : memref<8x8x32xf32, #tpu.memory_space<vmem>>, vector<8x8x32xf32>
    %cst = arith.constant dense<0.000000e+00> : vector<8x32xf32>
    %5 = vector.multi_reduction <add>, %4, %cst [1] : vector<8x8x32xf32> to vector<8x32xf32>
    %6 = arith.addf %3, %5 : vector<8x32xf32>
    %c0_5 = arith.constant 0 : index
    %c0_6 = arith.constant 0 : index
    %7 = vector.load %arg10[%c0_5, %c0_6] : memref<8x32xf32, #tpu.memory_space<vmem>>, vector<8x32xf32>
    tpu.vector_store %arg10[%c0_5, %c0_6], %6 {strides = array<i32>} : memref<8x32xf32, #tpu.memory_space<vmem>>, vector<8x32xf32>,
    %c1_i32 = arith.constant 1 : i32
    %8 = arith.cmpi eq, %arg1, %c1_i32 : i32
    %9 = arith.extui %8 : i1 to i32
    %c0_i32_7 = arith.constant 0 : i32
    %10 = arith.cmpi ne, %9, %c0_i32_7 : i32
    scf.if %10 {
      %c0_8 = arith.constant 0 : index
      %c0_9 = arith.constant 0 : index
      %11 = vector.load %arg10[%c0_8, %c0_9] : memref<8x32xf32, #tpu.memory_space<vmem>>, vector<8x32xf32>
      %cst_10 = arith.constant 6.250000e-02 : f32
      %12 = vector.broadcast %cst_10 : f32 to vector<8x32xf32>
      %13 = arith.mulf %11, %12 : vector<8x32xf32>
      %c0_11 = arith.constant 0 : index
      %c0_12 = arith.constant 0 : index
      %14 = vector.load %arg3[%c0_11, %c0_12] : memref<32x32xbf16, #tpu.memory_space<vmem>>, vector<32x32xbf16>
      %c0_13 = arith.constant 0 : index
      %c0_14 = arith.constant 0 : index
      %15 = vector.load %arg4[%c0_13, %c0_14] : memref<1x32xf32, #tpu.memory_space<vmem>>, vector<1x32xf32>
      %16 = arith.truncf %13 : vector<8x32xf32> to vector<8x32xbf16>
      %cst_15 = arith.constant dense<0.000000e+00> : vector<8x32xf32>
      %17 = tpu.matmul %16, %14, %cst_15 {dimension_numbers = #tpu.dot_dimension_numbers<[1], [0], [0], [1], [0, 0, 1, 1], [], []>} : vector<8x32xbf16>, vector<32x32xbf16>, vector<8x32xf32> -> vector<8x32xf32>
      %18 = vector.broadcast %15 : vector<1x32xf32> to vector<8x32xf32>
      %19 = arith.addf %17, %18 : vector<8x32xf32>
      %cst_16 = arith.constant 0.000000e+00 : f32
      %20 = vector.broadcast %cst_16 : f32 to vector<8x32xf32>
      %21 = arith.maximumf %19, %20 : vector<8x32xf32>
      %c0_17 = arith.constant 0 : index
      %c0_18 = arith.constant 0 : index
      %22 = vector.load %arg5[%c0_17, %c0_18] : memref<32x32xbf16, #tpu.memory_space<vmem>>, vector<32x32xbf16>
      %c0_19 = arith.constant 0 : index
      %c0_20 = arith.constant 0 : index
      %23 = vector.load %arg6[%c0_19, %c0_20] : memref<1x32xf32, #tpu.memory_space<vmem>>, vector<1x32xf32>
      %24 = arith.truncf %21 : vector<8x32xf32> to vector<8x32xbf16>
      %cst_21 = arith.constant dense<0.000000e+00> : vector<8x32xf32>
      %25 = tpu.matmul %24, %22, %cst_21 {dimension_numbers = #tpu.dot_dimension_numbers<[1], [0], [0], [1], [0, 0, 1, 1], [], []>} : vector<8x32xbf16>, vector<32x32xbf16>, vector<8x32xf32> -> vector<8x32xf32>
      %26 = vector.broadcast %23 : vector<1x32xf32> to vector<8x32xf32>
      %27 = arith.addf %25, %26 : vector<8x32xf32>
      %cst_22 = arith.constant 0.000000e+00 : f32
      %28 = vector.broadcast %cst_22 : f32 to vector<8x32xf32>
      %29 = arith.maximumf %27, %28 : vector<8x32xf32>
      %c0_23 = arith.constant 0 : index
      %c0_24 = arith.constant 0 : index
      %30 = vector.load %arg7[%c0_23, %c0_24] : memref<32x8xbf16, #tpu.memory_space<vmem>>, vector<32x8xbf16>
      %c0_25 = arith.constant 0 : index
      %c0_26 = arith.constant 0 : index
      %31 = vector.load %arg8[%c0_25, %c0_26] : memref<1x8xf32, #tpu.memory_space<vmem>>, vector<1x8xf32>
      %32 = arith.truncf %29 : vector<8x32xf32> to vector<8x32xbf16>
      %cst_27 = arith.constant dense<0.000000e+00> : vector<8x8xf32>
      %33 = tpu.matmul %32, %30, %cst_27 {dimension_numbers = #tpu.dot_dimension_numbers<[1], [0], [0], [1], [0, 0, 1, 1], [], []>} : vector<8x32xbf16>, vector<32x8xbf16>, vector<8x8xf32> -> vector<8x8xf32>
      %34 = vector.broadcast %31 : vector<1x8xf32> to vector<8x8xf32>
      %35 = arith.addf %33, %34 : vector<8x8xf32>
      %cst_28 = arith.constant dense<0xFF800000> : vector<8xf32>
      %36 = vector.multi_reduction <maximumf>, %35, %cst_28 [1] : vector<8x8xf32> to vector<8xf32>
      %37 = vector.shape_cast %36 : vector<8xf32> to vector<8x1xf32>
      %38 = vector.broadcast %37 : vector<8x1xf32> to vector<8x8xf32>
      %39 = arith.subf %35, %38 : vector<8x8xf32>
      %40 = math.exp %39 : vector<8x8xf32>
      %cst_29 = arith.constant dense<0.000000e+00> : vector<8xf32>
      %41 = vector.multi_reduction <add>, %40, %cst_29 [1] : vector<8x8xf32> to vector<8xf32>
      %42 = vector.shape_cast %41 : vector<8xf32> to vector<8x1xf32>
      %43 = tpu.reciprocal %42 {approx = true} : vector<8x1xf32> -> vector<8x1xf32>
      %cst_30 = arith.constant 2.000000e+00 : f32
      %44 = vector.broadcast %cst_30 : f32 to vector<8x1xf32>
      %45 = arith.mulf %44, %43 : vector<8x1xf32>
      %46 = vector.broadcast %45 : vector<8x1xf32> to vector<8x8xf32>
      %47 = arith.mulf %40, %46 : vector<8x8xf32>
      %48 = tpu.iota {dimensions = array<i32: 1>} : vector<8x8xi32>
      %c4_i32 = arith.constant 4 : i32
      %49 = vector.broadcast %c4_i32 : i32 to vector<8x8xi32>
      %50 = arith.cmpi sge, %48, %49 : vector<8x8xi32>
      %c4_i32_31 = arith.constant 4 : i32
      %51 = vector.broadcast %c4_i32_31 : i32 to vector<8x8xi32>
      %52 = arith.subi %48, %51 : vector<8x8xi32>
      %53 = arith.select %50, %52, %48 : vector<8x8xi1>, vector<8x8xi32>
      %54 = vector.broadcast %37 : vector<8x1xf32> to vector<8x8xf32>
      %55 = arith.cmpf oeq, %35, %54 : vector<8x8xf32>
      %c4_i32_32 = arith.constant 4 : i32
      %56 = vector.broadcast %c4_i32_32 : i32 to vector<8x8xi32>
      %57 = arith.select %55, %53, %56 : vector<8x8xi1>, vector<8x8xi32>
      %cst_33 = arith.constant dense<2147483647> : vector<8xi32>
      %58 = vector.multi_reduction <minsi>, %57, %cst_33 [1] : vector<8x8xi32> to vector<8xi32>
      %59 = vector.shape_cast %58 : vector<8xi32> to vector<8x1xi32>
      %60 = vector.broadcast %59 : vector<8x1xi32> to vector<8x8xi32>
      %61 = arith.cmpi eq, %53, %60 : vector<8x8xi32>
      %cst_34 = arith.constant 1.000000e+00 : f32
      %cst_35 = arith.constant 0.000000e+00 : f32
      %62 = vector.broadcast %cst_34 : f32 to vector<8x8xf32>
      %63 = vector.broadcast %cst_35 : f32 to vector<8x8xf32>
      %64 = arith.select %61, %62, %63 : vector<8x8xi1>, vector<8x8xf32>
      %c4_i32_36 = arith.constant 4 : i32
      %65 = vector.broadcast %c4_i32_36 : i32 to vector<8x8xi32>
      %66 = arith.cmpi slt, %48, %65 : vector<8x8xi32>
      %67 = arith.select %66, %47, %64 : vector<8x8xi1>, vector<8x8xf32>
      %c0_37 = arith.constant 0 : index
      %c0_38 = arith.constant 0 : index
      %68 = vector.load %arg9[%c0_37, %c0_38] : memref<8x8xf32, #tpu.memory_space<vmem>>, vector<8x8xf32>
      tpu.vector_store %arg9[%c0_37, %c0_38], %67 {strides = array<i32>} : memref<8x8xf32, #tpu.memory_space<vmem>>, vector<8x8xf32>,
    } else {
    }
    return
  }
  func.func @transform_0(%arg0: i32, %arg1: i32) -> (i32, i32, i32) {
    %c0_i32 = arith.constant 0 : i32
    %c0_i32_0 = arith.constant 0 : i32
    return %arg0, %arg1, %c0_i32 : i32, i32, i32
  }
  func.func @transform_1(%arg0: i32, %arg1: i32) -> (i32, i32) {
    %c0_i32 = arith.constant 0 : i32
    %c0_i32_0 = arith.constant 0 : i32
    %c0_i32_1 = arith.constant 0 : i32
    return %c0_i32, %c0_i32_0 : i32, i32
  }
  func.func @transform_2(%arg0: i32, %arg1: i32) -> (i32, i32) {
    %c0_i32 = arith.constant 0 : i32
    %c0_i32_0 = arith.constant 0 : i32
    %c0_i32_1 = arith.constant 0 : i32
    return %c0_i32, %c0_i32_0 : i32, i32
  }
  func.func @transform_3(%arg0: i32, %arg1: i32) -> (i32, i32) {
    %c0_i32 = arith.constant 0 : i32
    %c0_i32_0 = arith.constant 0 : i32
    %c0_i32_1 = arith.constant 0 : i32
    return %c0_i32, %c0_i32_0 : i32, i32
  }
  func.func @transform_4(%arg0: i32, %arg1: i32) -> (i32, i32) {
    %c0_i32 = arith.constant 0 : i32
    %c0_i32_0 = arith.constant 0 : i32
    %c0_i32_1 = arith.constant 0 : i32
    return %c0_i32, %c0_i32_0 : i32, i32
  }
  func.func @transform_5(%arg0: i32, %arg1: i32) -> (i32, i32) {
    %c0_i32 = arith.constant 0 : i32
    %c0_i32_0 = arith.constant 0 : i32
    %c0_i32_1 = arith.constant 0 : i32
    return %c0_i32, %c0_i32_0 : i32, i32
  }
  func.func @transform_6(%arg0: i32, %arg1: i32) -> (i32, i32) {
    %c0_i32 = arith.constant 0 : i32
    %c0_i32_0 = arith.constant 0 : i32
    %c0_i32_1 = arith.constant 0 : i32
    return %c0_i32, %c0_i32_0 : i32, i32
  }
  func.func @transform_7(%arg0: i32, %arg1: i32) -> (i32, i32) {
    %c0_i32 = arith.constant 0 : i32
    %c0_i32_0 = arith.constant 0 : i32
    return %arg0, %c0_i32 : i32, i32
  }
}

</mosaic_0001>

<llo_original>
// kernel: tpu_custom_call.1
$region0: #{tpu_custom_call.1}
  #allocation0 [shape = 'u32[]', space=smem, size = 0x4, offset = 0x4, fixed_abs, tag = 'smem constant byte address 0x4 - core index']
  #allocation1 [shape = 'u32[144,128]{1,0:T(1,128)}', space=vmem, size = 0x12000, scoped, tag = 'internal scratch']
  #allocation2 [shape = 'f32[8,32]{1,0:T(8,128)}', space=vmem, size = 0x1000, scoped, tag = 'scratch operand']
  %s0 = inlined_call_operand.hbm [shape: f32[16,16,32], index: 0, kind: input, shape index: {}]
  %s1 = inlined_call_operand.vmem [shape: bf16[32,32], index: 1, kind: input, shape index: {}]
  %s2 = inlined_call_operand.vmem [shape: f32[1,32], index: 2, kind: input, shape index: {}]
  %s3 = inlined_call_operand.hbm [shape: bf16[32,32], index: 3, kind: input, shape index: {}]
  %s4 = inlined_call_operand.vmem [shape: f32[1,32], index: 4, kind: input, shape index: {}]
  %s5 = inlined_call_operand.vmem [shape: bf16[32,8], index: 5, kind: input, shape index: {}]
  %s6 = inlined_call_operand.vmem [shape: f32[1,8], index: 6, kind: input, shape index: {}]
  %s7 = inlined_call_operand.vmem [shape: f32[16,8], index: 7, kind: output, shape index: {}]
  %s8 = sld [smem:[#allocation0]]
  $region77: #{tpu_custom_call.1} parent=0
    _
  %s10 = ssub.s32 1, %s8
  %s11 = scalar_select 0, %s10, %s8
  $region1: #{tpu_custom_call.1} parent=0
    #allocation3 [shape = 'u8[65536]{0}', space=vmem, size = 0x10000, scoped, tag = 'input window, operand 0']
    #allocation4 [shape = 's32[2]{0}', space=sflag, size = 0x8, scoped, tag = 'scoped memory for tpu_custom_call.1']
    #allocation5 [shape = 'u8[8192]{0}', space=vmem, size = 0x2000, scoped, tag = 'input window, operand 3, single buffered']
    #allocation6 [shape = 's32[1]{0}', space=sflag, size = 0x4, scoped, tag = 'scoped memory for tpu_custom_call.1']
    %12 = vsyncpa [#allocation4], 0
    %s13 = scalar_lea.sflag [#allocation4], 1
    %14 = vsyncpa %s13, 0
    %15 = vsyncpa [#allocation6], 0
    loop: start=0, step=1, limit=6
    $region2: #{tpu_custom_call.1} parent=1 // loop_pre_header
      _
    $region3: #{tpu_custom_call.1} parent=1 // loop_header
      %s17 = sphi 0, %s21
      %p18 = scmp.ge.s32.totalorder %s17, 6
      %s24 = sphi 0, %s36
      %s25 = sphi 0, %s32
      %s26 = sphi 0, %s24
      %s27 = sphi 0, %s25
      %s28 = sphi 0, %s26
      %s29 = sphi 0, %s27
      %s41 = sphi 0, %s43
      %s44 = sphi 0, %s41
      %s45 = sphi 0, %s44
      %s61 = sphi 0, %s45
      %s65 = sphi 0, %s65
      %s67 = sphi 0, %s65
      %s68 = sphi 0, %s67
      %s82 = sphi 0, %s68
      %s86 = sphi 0, %s86
      %s88 = sphi 0, %s86
      %s89 = sphi 0, %s88
      %s103 = sphi 0, %s89
      %s107 = sphi 0, %s107
      %s109 = sphi 0, %s107
      %s110 = sphi 0, %s109
      %s124 = sphi 0, %s110
      %s128 = sphi 0, %s128
      %s130 = sphi 0, %s128
      %s131 = sphi 0, %s130
      %s145 = sphi 0, %s131
      %s149 = sphi 0, %s149
      %s151 = sphi 0, %s149
      %s152 = sphi 0, %s151
      %s166 = sphi 0, %s152
      %s170 = sphi 0, %s170
      %s172 = sphi 0, %s170
      %s173 = sphi 0, %s172
      %s187 = sphi 0, %s173
      %s193 = sphi 0, %s195
      %s196 = sphi 0, %s193
      %s197 = sphi 0, %s196
      %s213 = sphi 0, %s197
    $region4: #{tpu_custom_call.1} parent=1 // loop_header_branch
      %20 = sbr.rel (%p18) target = $region8
    $region5: #{tpu_custom_call.1} parent=1 // loop_body
      %s22 = ssub.s32 %s17, 1
      %s23 = ssub.s32 %s17, 2
      %s30 = sadd.s32 1, %s25
      %p31 = scmp.ge.s32.totalorder %s30, 2
      %s32 = scalar_select %p31, 0, %s30
      %s33 = sadd.s32 1, %s24
      %s34 = scalar_select %p31, %s33, %s24
      %p35 = scmp.ge.s32.totalorder %s34, 2
      %s36 = scalar_select %p35, 0, %s34
      %s37 = ssub.s32 %s24, %s36
      %s38 = ssub.s32 %s25, %s32
      %s39 = sor.u32 %s37, %s38
      %p40 = scmp.eq.s32.totalorder %s39, 0
      %s42 = sadd.s32 %s41, 1
      %s43 = scalar_select %p40, %s41, %s42
      %p46 = pneg %p40
      %p47 = scmp.eq.s32.totalorder %s17, 3
      %p48 = por %p46, %p47
      %p49 = scmp.ne.s32.totalorder %s41, %s44
      %p50 = scmp.eq.s32.totalorder %s17, 0
      %p51 = por %p49, %p50
      %p52 = scmp.ne.s32.totalorder %s41, %s44
      %p53 = scmp.eq.s32.totalorder %s22, 3
      %p54 = por %p52, %p53
      %p55 = scmp.ne.s32.totalorder %s44, %s45
      %p56 = scmp.eq.s32.totalorder %s22, 0
      %p57 = por %p55, %p56
      %p58 = scmp.ne.s32.totalorder %s44, %s45
      %p59 = scmp.eq.s32.totalorder %s23, 3
      %p60 = por %p58, %p59
      %p62 = scmp.ne.s32.totalorder %s45, %s61
      %p63 = scmp.eq.s32.totalorder %s23, 0
      %p64 = por %p62, %p63
      %s66 = sadd.s32 %s65, 1
      %p69 = scmp.eq.s32.totalorder %s17, 3
      %p70 = scmp.ne.s32.totalorder %s65, %s67
      %p71 = scmp.eq.s32.totalorder %s17, 0
      %p72 = por %p70, %p71
      %p73 = scmp.ne.s32.totalorder %s65, %s67
      %p74 = scmp.eq.s32.totalorder %s22, 3
      %p75 = por %p73, %p74
      %p76 = scmp.ne.s32.totalorder %s67, %s68
      %p77 = scmp.eq.s32.totalorder %s22, 0
      %p78 = por %p76, %p77
      %p79 = scmp.ne.s32.totalorder %s67, %s68
      %p80 = scmp.eq.s32.totalorder %s23, 3
      %p81 = por %p79, %p80
      %p83 = scmp.ne.s32.totalorder %s68, %s82
      %p84 = scmp.eq.s32.totalorder %s23, 0
      %p85 = por %p83, %p84
      %s87 = sadd.s32 %s86, 1
      %p90 = scmp.eq.s32.totalorder %s17, 3
      %p91 = scmp.ne.s32.totalorder %s86, %s88
      %p92 = scmp.eq.s32.totalorder %s17, 0
      %p93 = por %p91, %p92
      %p94 = scmp.ne.s32.totalorder %s86, %s88
      %p95 = scmp.eq.s32.totalorder %s22, 3
      %p96 = por %p94, %p95
      %p97 = scmp.ne.s32.totalorder %s88, %s89
      %p98 = scmp.eq.s32.totalorder %s22, 0
      %p99 = por %p97, %p98
      %p100 = scmp.ne.s32.totalorder %s88, %s89
      %p101 = scmp.eq.s32.totalorder %s23, 3
      %p102 = por %p100, %p101
      %p104 = scmp.ne.s32.totalorder %s89, %s103
      %p105 = scmp.eq.s32.totalorder %s23, 0
      %p106 = por %p104, %p105
      %s108 = sadd.s32 %s107, 1
      %p111 = scmp.eq.s32.totalorder %s17, 3
      %p112 = scmp.ne.s32.totalorder %s107, %s109
      %p113 = scmp.eq.s32.totalorder %s17, 0
      %p114 = por %p112, %p113
      %p115 = scmp.ne.s32.totalorder %s107, %s109
      %p116 = scmp.eq.s32.totalorder %s22, 3
      %p117 = por %p115, %p116
      %p118 = scmp.ne.s32.totalorder %s109, %s110
      %p119 = scmp.eq.s32.totalorder %s22, 0
      %p120 = por %p118, %p119
      %p121 = scmp.ne.s32.totalorder %s109, %s110
      %p122 = scmp.eq.s32.totalorder %s23, 3
      %p123 = por %p121, %p122
      %p125 = scmp.ne.s32.totalorder %s110, %s124
      %p126 = scmp.eq.s32.totalorder %s23, 0
      %p127 = por %p125, %p126
      %s129 = sadd.s32 %s128, 1
      %p132 = scmp.eq.s32.totalorder %s17, 3
      %p133 = scmp.ne.s32.totalorder %s128, %s130
      %p134 = scmp.eq.s32.totalorder %s17, 0
      %p135 = por %p133, %p134
      %p136 = scmp.ne.s32.totalorder %s128, %s130
      %p137 = scmp.eq.s32.totalorder %s22, 3
      %p138 = por %p136, %p137
      %p139 = scmp.ne.s32.totalorder %s130, %s131
      %p140 = scmp.eq.s32.totalorder %s22, 0
      %p141 = por %p139, %p140
      %p142 = scmp.ne.s32.totalorder %s130, %s131
      %p143 = scmp.eq.s32.totalorder %s23, 3
      %p144 = por %p142, %p143
      %p146 = scmp.ne.s32.totalorder %s131, %s145
      %p147 = scmp.eq.s32.totalorder %s23, 0
      %p148 = por %p146, %p147
      %s150 = sadd.s32 %s149, 1
      %p153 = scmp.eq.s32.totalorder %s17, 3
      %p154 = scmp.ne.s32.totalorder %s149, %s151
      %p155 = scmp.eq.s32.totalorder %s17, 0
      %p156 = por %p154, %p155
      %p157 = scmp.ne.s32.totalorder %s149, %s151
      %p158 = scmp.eq.s32.totalorder %s22, 3
      %p159 = por %p157, %p158
      %p160 = scmp.ne.s32.totalorder %s151, %s152
      %p161 = scmp.eq.s32.totalorder %s22, 0
      %p162 = por %p160, %p161
      %p163 = scmp.ne.s32.totalorder %s151, %s152
      %p164 = scmp.eq.s32.totalorder %s23, 3
      %p165 = por %p163, %p164
      %p167 = scmp.ne.s32.totalorder %s152, %s166
      %p168 = scmp.eq.s32.totalorder %s23, 0
      %p169 = por %p167, %p168
      %s171 = sadd.s32 %s170, 1
      %p174 = scmp.eq.s32.totalorder %s17, 3
      %p175 = scmp.ne.s32.totalorder %s170, %s172
      %p176 = scmp.eq.s32.totalorder %s17, 0
      %p177 = por %p175, %p176
      %p178 = scmp.ne.s32.totalorder %s170, %s172
      %p179 = scmp.eq.s32.totalorder %s22, 3
      %p180 = por %p178, %p179
      %p181 = scmp.ne.s32.totalorder %s172, %s173
      %p182 = scmp.eq.s32.totalorder %s22, 0
      %p183 = por %p181, %p182
      %p184 = scmp.ne.s32.totalorder %s172, %s173
      %p185 = scmp.eq.s32.totalorder %s23, 3
      %p186 = por %p184, %p185
      %p188 = scmp.ne.s32.totalorder %s173, %s187
      %p189 = scmp.eq.s32.totalorder %s23, 0
      %p190 = por %p188, %p189
      %s191 = ssub.s32 %s24, %s36
      %p192 = scmp.eq.s32.totalorder %s191, 0
      %s194 = sadd.s32 %s193, 1
      %s195 = scalar_select %p192, %s193, %s194
      %p198 = pneg %p192
      %p199 = scmp.eq.s32.totalorder %s17, 3
      %p200 = por %p198, %p199
      %p201 = scmp.ne.s32.totalorder %s193, %s196
      %p202 = scmp.eq.s32.totalorder %s17, 0
      %p203 = por %p201, %p202
      %p204 = scmp.ne.s32.totalorder %s193, %s196
      %p205 = scmp.eq.s32.totalorder %s22, 3
      %p206 = por %p204, %p205
      %p207 = scmp.ne.s32.totalorder %s196, %s197
      %p208 = scmp.eq.s32.totalorder %s22, 0
      %p209 = por %p207, %p208
      %p210 = scmp.ne.s32.totalorder %s196, %s197
      %p211 = scmp.eq.s32.totalorder %s23, 3
      %p212 = por %p210, %p211
      %p214 = scmp.ne.s32.totalorder %s197, %s213
      %p215 = scmp.eq.s32.totalorder %s23, 0
      %p216 = por %p214, %p215
      %p217 = scmp.le.s32.totalorder 1, %s17
      %p218 = scmp.lt.s32.totalorder %s17, 5
      %p219 = pnand %p217, %p218
      %p220 = pneg %p219
      // Predicated region
      $region9: #{tpu_custom_call.1} parent=5 // pred_check
        _
      $region10: #{tpu_custom_call.1} parent=5 // pred_check_branch
        %222 = sbr.rel (%p219) target = $region12
      $region11: #{tpu_custom_call.1} parent=5 // pred_region
        %s223 = ssub.s32 %s17, 1
        // Predicated region
        $region13: #{tpu_custom_call.1} parent=11 // pred_check
          %p224 = pneg %p78
        $region14: #{tpu_custom_call.1} parent=11 // pred_check_branch
          %226 = sbr.rel (%p224) target = $region16
        $region15: #{tpu_custom_call.1} parent=11 // pred_region
          _
        $region16: #{tpu_custom_call.1} parent=11 // pred_fallthru
          _
        // Predicated region
        $region17: #{tpu_custom_call.1} parent=11 // pred_check
          %p227 = pneg %p99
        $region18: #{tpu_custom_call.1} parent=11 // pred_check_branch
          %229 = sbr.rel (%p227) target = $region20
        $region19: #{tpu_custom_call.1} parent=11 // pred_region
          _
        $region20: #{tpu_custom_call.1} parent=11 // pred_fallthru
          _
        // Predicated region
        $region21: #{tpu_custom_call.1} parent=11 // pred_check
          %p230 = pneg %p120
        $region22: #{tpu_custom_call.1} parent=11 // pred_check_branch
          %232 = sbr.rel (%p230) target = $region24
        $region23: #{tpu_custom_call.1} parent=11 // pred_region
          %s234 = ssub.s32 256, 256
          %235 = vsyncadd [#allocation6], %s234
          %s236 = sshll.u32 [#allocation5], 4
          %s237 = int_to_ptr.vmem [resolvable:$true] %s236
          %242 = dma.hbm_to_vmem [thread:$0]  %s3, 256, %s237, [#allocation6], 64, 64, 4
        $region24: #{tpu_custom_call.1} parent=11 // pred_fallthru
          _
        // Predicated region
        $region25: #{tpu_custom_call.1} parent=11 // pred_check
          %p243 = pneg %p141
        $region26: #{tpu_custom_call.1} parent=11 // pred_check_branch
          %245 = sbr.rel (%p243) target = $region28
        $region27: #{tpu_custom_call.1} parent=11 // pred_region
          _
        $region28: #{tpu_custom_call.1} parent=11 // pred_fallthru
          _
        // Predicated region
        $region29: #{tpu_custom_call.1} parent=11 // pred_check
          %p246 = pneg %p162
        $region30: #{tpu_custom_call.1} parent=11 // pred_check_branch
          %248 = sbr.rel (%p246) target = $region32
        $region31: #{tpu_custom_call.1} parent=11 // pred_region
          _
        $region32: #{tpu_custom_call.1} parent=11 // pred_fallthru
          _
        // Predicated region
        $region33: #{tpu_custom_call.1} parent=11 // pred_check
          %p249 = pneg %p183
        $region34: #{tpu_custom_call.1} parent=11 // pred_check_branch
          %251 = sbr.rel (%p249) target = $region36
        $region35: #{tpu_custom_call.1} parent=11 // pred_region
          _
        $region36: #{tpu_custom_call.1} parent=11 // pred_fallthru
          _
      $region12: #{tpu_custom_call.1} parent=5 // pred_fallthru
        _
      %p252 = scmp.lt.s32.totalorder %s17, 4
      // Predicated region
      $region37: #{tpu_custom_call.1} parent=5 // pred_check
        %p253 = pneg %p252
      $region38: #{tpu_custom_call.1} parent=5 // pred_check_branch
        %255 = sbr.rel (%p253) target = $region40
      $region39: #{tpu_custom_call.1} parent=5 // pred_region
        // Predicated region
        $region41: #{tpu_custom_call.1} parent=39 // pred_check
          %p256 = pneg %p51
        $region42: #{tpu_custom_call.1} parent=39 // pred_check_branch
          %258 = sbr.rel (%p256) target = $region44
        $region43: #{tpu_custom_call.1} parent=39 // pred_region
          %s259 = sand.u32 %s41, 1
          %s260 = scalar_lea.sflag [#allocation4], %s259
          %s261 = sand.u32 %s41, 1
          %s262 = smul.addr %s261, 64
          %s263 = scalar_lea.vmem [#allocation3], %s262
          %s264 = smul.u32 8, %s24
          %s266 = ssub.s32 1024, 1024
          %267 = vsyncadd %s260, %s266
          %s268 = smul.addr %s264, 2
          %s269 = sadd.s32 %s25, %s268
          %s270 = smul.addr %s269, 128
          %s271 = scalar_lea.hbm %s0, %s270
          %s272 = sshll.u32 %s263, 4
          %s273 = int_to_ptr.vmem [resolvable:$true] %s272
          %278 = dma.hbm_to_vmem [thread:$0]  %s271, 1024, %s273, %s260, 256, 128, 8
        $region44: #{tpu_custom_call.1} parent=39 // pred_fallthru
          _
      $region40: #{tpu_custom_call.1} parent=5 // pred_fallthru
        _
      %p279 = scmp.le.s32.totalorder 1, %s17
      %p280 = scmp.lt.s32.totalorder %s17, 5
      %p281 = pnand %p279, %p280
      %p282 = pneg %p281
      // Predicated region
      $region45: #{tpu_custom_call.1} parent=5 // pred_check
        _
      $region46: #{tpu_custom_call.1} parent=5 // pred_check_branch
        %284 = sbr.rel (%p281) target = $region48
      $region47: #{tpu_custom_call.1} parent=5 // pred_region
        %s285 = ssub.s32 %s17, 1
        %s286 = sand.u32 %s44, 1
        %s287 = scalar_lea.sflag [#allocation4], %s286
        %s288 = sand.u32 %s44, 1
        %s289 = smul.addr %s288, 64
        %s290 = scalar_lea.vmem [#allocation3], %s289
        // Predicated region
        $region49: #{tpu_custom_call.1} parent=47 // pred_check
          %p291 = pneg %p57
        $region50: #{tpu_custom_call.1} parent=47 // pred_check_branch
          %293 = sbr.rel (%p291) target = $region52
        $region51: #{tpu_custom_call.1} parent=47 // pred_region
          %294 = dma.done %s287, 1024
        $region52: #{tpu_custom_call.1} parent=47 // pred_fallthru
          _
        // Predicated region
        $region53: #{tpu_custom_call.1} parent=47 // pred_check
          %p295 = pneg %p120
        $region54: #{tpu_custom_call.1} parent=47 // pred_check_branch
          %297 = sbr.rel (%p295) target = $region56
        $region55: #{tpu_custom_call.1} parent=47 // pred_region
          %298 = dma.done [#allocation6], 256
        $region56: #{tpu_custom_call.1} parent=47 // pred_fallthru
          _
        %s299 = sand.u32 %s44, 1
        %s300 = scalar_lea.sflag [#allocation4], %s299
        %s301 = sand.u32 %s44, 1
        %s302 = smul.addr %s301, 64
        %s303 = scalar_lea.vmem [#allocation3], %s302
        %p304 = pneg %p57
        %p305 = pneg %p54
        %p306 = pneg %p78
        %p307 = pneg %p75
        %p308 = pneg %p99
        %p309 = pneg %p96
        %p310 = pneg %p120
        %p311 = pneg %p117
        %p312 = pneg %p141
        %p313 = pneg %p138
        %p314 = pneg %p162
        %p315 = pneg %p159
        %p316 = pneg %p183
        %p317 = pneg %p180
        %p318 = pneg %p209
        %p319 = pneg %p206
        %p320 = scmp.lt.s32.totalorder %s26, 1
        %s321 = scalar_select %p320, %s26, 1
        %s322 = smul.addr %s321, 8
        %s323 = scalar_lea.vmem %s7, %s322
        %s324 = smul.u32 8, %s26
        %p325 = scmp.lt.s32.totalorder %s26, 1
        %s326 = scalar_select %p325, %s26, 1
        %s327 = smul.addr %s326, 8
        %s328 = scalar_lea.vmem %s7, %s327
        %p330 = scmp.eq.s32.totalorder %s27, 0
        // Predicated region
        $region57: #{tpu_custom_call.1} parent=47 // pred_check
          %p331 = pneg %p330
        $region58: #{tpu_custom_call.1} parent=47 // pred_check_branch
          %333 = sbr.rel (%p331) target = $region60
        $region59: #{tpu_custom_call.1} parent=47 // pred_region
          %vm334 = vcmask 261120
          %335 = vst.msk [vmem:[#allocation2] sm:$0xff] %vm334, 0.0
        $region60: #{tpu_custom_call.1} parent=47 // pred_fallthru
          _
        %v336 = vld [vmem:[#allocation2] sm:$0xff]
        %v337 = vld [vmem:[%s290] sm:$0xff]
        %v338 = vld [vmem:[%s290 + $0x8] sm:$0xff]
        %v339 = vld [vmem:[%s290 + $0x10] sm:$0xff]
        %v340 = vld [vmem:[%s290 + $0x18] sm:$0xff]
        %v341 = vld [vmem:[%s290 + $0x20] sm:$0xff]
        %v342 = vld [vmem:[%s290 + $0x28] sm:$0xff]
        %v343 = vld [vmem:[%s290 + $0x30] sm:$0xff]
        %v344 = vld [vmem:[%s290 + $0x38] sm:$0xff]
        %vm345 = vcmask 261120
        %v346 = vsel %vm345, %v337, 0.0
        %v347 = vrot.slane %v346, 4
        %v348 = vadd.f32 %v346, %v347
        %v349 = vrot.slane %v348, 2
        %v350 = vadd.f32 %v348, %v349
        %v351 = vrot.slane %v350, 1
        %v352 = vadd.f32 %v350, %v351
        %v353 = vsel %vm345, %v338, 0.0
        %v354 = vrot.slane %v353, 4
        %v355 = vadd.f32 %v353, %v354
        %v356 = vrot.slane %v355, 2
        %v357 = vadd.f32 %v355, %v356
        %v358 = vrot.slane %v357, 1
        %v359 = vadd.f32 %v357, %v358
        %v360 = vsel %vm345, %v339, 0.0
        %v361 = vrot.slane %v360, 4
        %v362 = vadd.f32 %v360, %v361
        %v363 = vrot.slane %v362, 2
        %v364 = vadd.f32 %v362, %v363
        %v365 = vrot.slane %v364, 1
        %v366 = vadd.f32 %v364, %v365
        %v367 = vsel %vm345, %v340, 0.0
        %v368 = vrot.slane %v367, 4
        %v369 = vadd.f32 %v367, %v368
        %v370 = vrot.slane %v369, 2
        %v371 = vadd.f32 %v369, %v370
        %v372 = vrot.slane %v371, 1
        %v373 = vadd.f32 %v371, %v372
        %v374 = vsel %vm345, %v341, 0.0
        %v375 = vrot.slane %v374, 4
        %v376 = vadd.f32 %v374, %v375
        %v377 = vrot.slane %v376, 2
        %v378 = vadd.f32 %v376, %v377
        %v379 = vrot.slane %v378, 1
        %v380 = vadd.f32 %v378, %v379
        %v381 = vsel %vm345, %v342, 0.0
        %v382 = vrot.slane %v381, 4
        %v383 = vadd.f32 %v381, %v382
        %v384 = vrot.slane %v383, 2
        %v385 = vadd.f32 %v383, %v384
        %v386 = vrot.slane %v385, 1
        %v387 = vadd.f32 %v385, %v386
        %v388 = vsel %vm345, %v343, 0.0
        %v389 = vrot.slane %v388, 4
        %v390 = vadd.f32 %v388, %v389
        %v391 = vrot.slane %v390, 2
        %v392 = vadd.f32 %v390, %v391
        %v393 = vrot.slane %v392, 1
        %v394 = vadd.f32 %v392, %v393
        %v395 = vsel %vm345, %v344, 0.0
        %v396 = vrot.slane %v395, 4
        %v397 = vadd.f32 %v395, %v396
        %v398 = vrot.slane %v397, 2
        %v399 = vadd.f32 %v397, %v398
        %v400 = vrot.slane %v399, 1
        %v401 = vadd.f32 %v399, %v400
        %vm410 = vcmask 1041409
        %v411 = vsel %vm410, %v359, %v352
        %vm412 = vcmask 1042434
        %v413 = vsel %vm412, %v366, %v411
        %vm414 = vcmask 1043459
        %v415 = vsel %vm414, %v373, %v413
        %vm416 = vcmask 1044484
        %v417 = vsel %vm416, %v380, %v415
        %vm418 = vcmask 1045509
        %v419 = vsel %vm418, %v387, %v417
        %vm420 = vcmask 1046534
        %v421 = vsel %vm420, %v394, %v419
        %vm422 = vcmask 1047559
        %v423 = vsel %vm422, %v401, %v421
        %v425 = vadd.f32 %v336, %v423
        %426 = vst.msk [vmem:[#allocation2] sm:$0xff] %vm345, %v425
        %p427 = scmp.eq.s32.totalorder %s27, 1
        // Predicated region
        $region61: #{tpu_custom_call.1} parent=47 // pred_check
          %p428 = pneg %p427
        $region62: #{tpu_custom_call.1} parent=47 // pred_check_branch
          %430 = sbr.rel (%p428) target = $region64
        $region63: #{tpu_custom_call.1} parent=47 // pred_region
          %v431 = vld [vmem:[#allocation2] sm:$0xff]
          %v432 = vmul.f32 %v431, 0.0625
          %v433 = vld [vmem:[%s1] sm:$0xf]
          %v434 = vld [vmem:[%s1 + $0x4] sm:$0xf]
          %v435 = vld [vmem:[%s1 + $0x8] sm:$0xf]
          %v436 = vld [vmem:[%s1 + $0xc] sm:$0xf]
          %v437 = vld [vmem:[%s2] sm:$0x1]
          %v438 = vpack.c.bf16 %v432, %v432
          %v440 = vlaneseq
          %v441 = vshrl.u32 %v440, 7
          %v442 = vsub.s32 0, %v441
          %v443 = vrot.slane %v437, %v442
          %v449 = vunpack.c.l.b16 %v433
          %v450 = vunpack.c.l.b16 %v434
          %v451 = vunpack.c.l.b16 %v435
          %v452 = vunpack.c.l.b16 %v436
          %v453 = vpack.c.b16 %v450, %v449
          %v454 = vpack.c.b16 %v452, %v451
          %v458 = vsel %vm345, %v438, 0
          %460 = vmatprep.subr.bf16.mxu0 0
          %461 = vmatpush1.bf16.msra.mxu0 0
          %462 = vmatprep.subr.bf16.mxu0 0
          %463 = vmatpush1.bf16.msra.mxu0 0
          %464 = vmatprep.subr.bf16.mxu0 0
          %465 = vmatpush1.bf16.msra.mxu0 0
          %466 = vmatprep.subr.bf16.mxu0 0
          %467 = vmatpush1.bf16.msra.mxu0 0
          %468 = vmatprep.subr.bf16.mxu0 0
          %469 = vmatpush1.bf16.msra.mxu0 0
          %470 = vmatprep.subr.bf16.mxu0 0
          %471 = vmatpush1.bf16.msra.mxu0 0
          %472 = vmatprep.subr.bf16.mxu0 0
          %473 = vmatpush1.bf16.msra.mxu0 %v454
          %474 = vmatprep.subr.bf16.mxu0 0
          %475 = vmatpush1.bf16.msra.mxu0 %v453
          %476 = vmatprep.subr.bf16.mxu0 0
          %477 = vmatpush2.bf16.msra.mxu0 0
          %478 = vmatprep.subr.bf16.mxu0 0
          %479 = vmatpush2.bf16.msra.mxu0 0
          %480 = vmatprep.subr.bf16.mxu0 0
          %481 = vmatpush2.bf16.msra.mxu0 0
          %482 = vmatprep.subr.bf16.mxu0 0
          %483 = vmatpush2.bf16.msra.mxu0 0
          %484 = vmatprep.subr.bf16.mxu0 0
          %485 = vmatpush2.bf16.msra.mxu0 0
          %486 = vmatprep.subr.bf16.mxu0 0
          %487 = vmatpush2.bf16.msra.mxu0 0
          %488 = vmatprep.subr.bf16.mxu0 0
          %489 = vmatpush2.bf16.msra.mxu0 0
          %490 = vmatprep.subr.bf16.mxu0 0
          %491 = vmatpush2.bf16.msra.mxu0 0
          %492 = vmatprep.mubr.bf16.mxu0 0
          %493 = vmatmul.mubr.bf16.gmra.mxu0 %v458
          %v494 = vpop.f32.mrf.mxu0
          %v495 = vadd.f32 %v443, %v494
          %v496 = vpop.f32.mrf.mxu0
          %v497 = vpop.f32.mrf.mxu0
          %v498 = vpop.f32.mrf.mxu0
          %499 = vdwg.mxu0
          %v500 = vmax.f32 %v495, 0.0
          %v501 = vld [vmem:[#allocation5] sm:$0xf]
          %v502 = vld [vmem:[#allocation5 + $0x4] sm:$0xf]
          %v503 = vld [vmem:[#allocation5 + $0x8] sm:$0xf]
          %v504 = vld [vmem:[#allocation5 + $0xc] sm:$0xf]
          %v505 = vld [vmem:[%s4] sm:$0x1]
          %v506 = vpack.c.bf16 %v500, %v500
          %v508 = vlaneseq
          %v509 = vshrl.u32 %v508, 7
          %v510 = vsub.s32 0, %v509
          %v511 = vrot.slane %v505, %v510
          %v517 = vunpack.c.l.b16 %v501
          %v518 = vunpack.c.l.b16 %v502
          %v519 = vunpack.c.l.b16 %v503
          %v520 = vunpack.c.l.b16 %v504
          %v521 = vpack.c.b16 %v518, %v517
          %v522 = vpack.c.b16 %v520, %v519
          %v526 = vsel %vm345, %v506, 0
          %528 = vmatprep.subr.bf16.mxu0 0
          %529 = vmatpush1.bf16.msra.mxu0 0
          %530 = vmatprep.subr.bf16.mxu0 0
          %531 = vmatpush1.bf16.msra.mxu0 0
          %532 = vmatprep.subr.bf16.mxu0 0
          %533 = vmatpush1.bf16.msra.mxu0 0
          %534 = vmatprep.subr.bf16.mxu0 0
          %535 = vmatpush1.bf16.msra.mxu0 0
          %536 = vmatprep.subr.bf16.mxu0 0
          %537 = vmatpush1.bf16.msra.mxu0 0
          %538 = vmatprep.subr.bf16.mxu0 0
          %539 = vmatpush1.bf16.msra.mxu0 0
          %540 = vmatprep.subr.bf16.mxu0 0
          %541 = vmatpush1.bf16.msra.mxu0 %v522
          %542 = vmatprep.subr.bf16.mxu0 0
          %543 = vmatpush1.bf16.msra.mxu0 %v521
          %544 = vmatprep.subr.bf16.mxu0 0
          %545 = vmatpush2.bf16.msra.mxu0 0
          %546 = vmatprep.subr.bf16.mxu0 0
          %547 = vmatpush2.bf16.msra.mxu0 0
          %548 = vmatprep.subr.bf16.mxu0 0
          %549 = vmatpush2.bf16.msra.mxu0 0
          %550 = vmatprep.subr.bf16.mxu0 0
          %551 = vmatpush2.bf16.msra.mxu0 0
          %552 = vmatprep.subr.bf16.mxu0 0
          %553 = vmatpush2.bf16.msra.mxu0 0
          %554 = vmatprep.subr.bf16.mxu0 0
          %555 = vmatpush2.bf16.msra.mxu0 0
          %556 = vmatprep.subr.bf16.mxu0 0
          %557 = vmatpush2.bf16.msra.mxu0 0
          %558 = vmatprep.subr.bf16.mxu0 0
          %559 = vmatpush2.bf16.msra.mxu0 0
          %560 = vmatprep.mubr.bf16.mxu0 0
          %561 = vmatmul.mubr.bf16.gmra.mxu0 %v526
          %v562 = vpop.f32.mrf.mxu0
          %v563 = vadd.f32 %v511, %v562
          %v564 = vpop.f32.mrf.mxu0
          %v565 = vpop.f32.mrf.mxu0
          %v566 = vpop.f32.mrf.mxu0
          %567 = vdwg.mxu0
          %v568 = vmax.f32 %v563, 0.0
          %v569 = vld [vmem:[%s5] sm:$0xf]
          %v570 = vld [vmem:[%s5 + $0x4] sm:$0xf]
          %v571 = vld [vmem:[%s5 + $0x8] sm:$0xf]
          %v572 = vld [vmem:[%s5 + $0xc] sm:$0xf]
          %v573 = vld [vmem:[%s6] sm:$0x1]
          %v574 = vpack.c.bf16 %v568, %v568
          %v576 = vlaneseq
          %v577 = vshrl.u32 %v576, 7
          %v578 = vsub.s32 0, %v577
          %v579 = vrot.slane %v573, %v578
          %v585 = vunpack.c.l.b16 %v569
          %v586 = vunpack.c.l.b16 %v570
          %v587 = vunpack.c.l.b16 %v571
          %v588 = vunpack.c.l.b16 %v572
          %v589 = vpack.c.b16 %v586, %v585
          %v590 = vpack.c.b16 %v588, %v587
          %v594 = vsel %vm345, %v574, 0
          %596 = vmatprep.subr.bf16.mxu0 0
          %597 = vmatpush1.bf16.msra.mxu0 0
          %598 = vmatprep.subr.bf16.mxu0 0
          %599 = vmatpush1.bf16.msra.mxu0 0
          %600 = vmatprep.subr.bf16.mxu0 0
          %601 = vmatpush1.bf16.msra.mxu0 0
          %602 = vmatprep.subr.bf16.mxu0 0
          %603 = vmatpush1.bf16.msra.mxu0 0
          %604 = vmatprep.subr.bf16.mxu0 0
          %605 = vmatpush1.bf16.msra.mxu0 0
          %606 = vmatprep.subr.bf16.mxu0 0
          %607 = vmatpush1.bf16.msra.mxu0 0
          %608 = vmatprep.subr.bf16.mxu0 0
          %609 = vmatpush1.bf16.msra.mxu0 %v590
          %610 = vmatprep.subr.bf16.mxu0 0
          %611 = vmatpush1.bf16.msra.mxu0 %v589
          %612 = vmatprep.subr.bf16.mxu0 0
          %613 = vmatpush2.bf16.msra.mxu0 0
          %614 = vmatprep.subr.bf16.mxu0 0
          %615 = vmatpush2.bf16.msra.mxu0 0
          %616 = vmatprep.subr.bf16.mxu0 0
          %617 = vmatpush2.bf16.msra.mxu0 0
          %618 = vmatprep.subr.bf16.mxu0 0
          %619 = vmatpush2.bf16.msra.mxu0 0
          %620 = vmatprep.subr.bf16.mxu0 0
          %621 = vmatpush2.bf16.msra.mxu0 0
          %622 = vmatprep.subr.bf16.mxu0 0
          %623 = vmatpush2.bf16.msra.mxu0 0
          %624 = vmatprep.subr.bf16.mxu0 0
          %625 = vmatpush2.bf16.msra.mxu0 0
          %626 = vmatprep.subr.bf16.mxu0 0
          %627 = vmatpush2.bf16.msra.mxu0 0
          %628 = vmatprep.mubr.bf16.mxu0 0
          %629 = vmatmul.mubr.bf16.gmra.mxu0 %v594
          %v630 = vpop.f32.mrf.mxu0
          %v631 = vadd.f32 %v579, %v630
          %v632 = vpop.f32.mrf.mxu0
          %v633 = vpop.f32.mrf.mxu0
          %v634 = vpop.f32.mrf.mxu0
          %635 = vdwg.mxu0
          %vm636 = vcmask 64512
          %v637 = vsel %vm636, %v631, -inf
          %638 = vmax.xlane.f32.xlu0 %v637
          %v639 = vpop.xlane.xlu0 %638
          %v640 = vsub.f32 %v631, %v639
          %v641 = vmul.f32 %v640, 1.442695
          %v642 = vpow.pop %v641
          %v643 = vsel %vm636, %v642, 0.0
          %644 = vadd.xlane.f32.xlu0 %v643
          %v645 = vpop.xlane.xlu0 %644
          %v646 = vrcp.pop %v645
          %v647 = vmul.f32 %v646, 2.0
          %v648 = vmul.f32 %v642, %v647
          %v649 = vlaneseq
          %v650 = vand.u32 %v649, 127
          %vm651 = vcmp.ge.s32.totalorder %v650, 4
          %v652 = vsub.s32 %v650, 4
          %v653 = vsel %vm651, %v652, %v650
          %vm654 = vcmp.eq.f32.partialorder %v631, %v639
          %v655 = vsel %vm654, %v653, 4
          %v656 = vsel %vm636, %v655, 2147483647
          %v657 = vand.u32 %v656, 65535
          %v658 = vshra.s32 %v656, 16
          %v659 = vcvt.s32.f32 %v657
          %v660 = vcvt.s32.f32 %v658
          %661 = vmin.xlane.f32.xlu0 %v660
          %v662 = vpop.xlane.xlu0 %661
          %vm663 = vcmp.eq.f32.partialorder %v660, %v662
          %v664 = vsel %vm663, %v659, inf
          %665 = vmin.xlane.f32.xlu0 %v664
          %v666 = vpop.xlane.xlu0 %665
          %v667 = vcvt.f32.s32 %v666
          %v668 = vcvt.f32.s32 %v662
          %v669 = vshll.u32 %v668, 16
          %v670 = vadd.s32 %v669, %v667
          %vm671 = vcmp.eq.s32.totalorder %v653, %v670
          %v672 = vsel %vm671, 1.0, 0.0
          %vm673 = vcmp.lt.s32.totalorder %v650, 4
          %v674 = vsel %vm673, %v648, %v672
          %675 = vst.msk [vmem:[%s328] sm:$0xff] %vm636, %v674
        $region64: #{tpu_custom_call.1} parent=47 // pred_fallthru
          _
        %p676 = scmp.lt.s32.totalorder %s26, 1
        %s677 = scalar_select %p676, %s26, 1
        %s678 = smul.addr %s677, 8
        %s679 = scalar_lea.vmem %s7, %s678
        // Predicated region
        $region65: #{tpu_custom_call.1} parent=47 // pred_check
          %p680 = pneg %p206
        $region66: #{tpu_custom_call.1} parent=47 // pred_check_branch
          %682 = sbr.rel (%p680) target = $region68
        $region67: #{tpu_custom_call.1} parent=47 // pred_region
          _
        $region68: #{tpu_custom_call.1} parent=47 // pred_fallthru
          _
      $region48: #{tpu_custom_call.1} parent=5 // pred_fallthru
        _
      %p683 = scmp.le.s32.totalorder 2, %s17
      // Predicated region
      $region69: #{tpu_custom_call.1} parent=5 // pred_check
        %p684 = pneg %p683
      $region70: #{tpu_custom_call.1} parent=5 // pred_check_branch
        %686 = sbr.rel (%p684) target = $region72
      $region71: #{tpu_custom_call.1} parent=5 // pred_region
        %s687 = ssub.s32 %s17, 2
        // Predicated region
        $region73: #{tpu_custom_call.1} parent=71 // pred_check
          %p688 = pneg %p212
        $region74: #{tpu_custom_call.1} parent=71 // pred_check_branch
          %690 = sbr.rel (%p688) target = $region76
        $region75: #{tpu_custom_call.1} parent=71 // pred_region
          %p691 = scmp.lt.s32.totalorder %s28, 1
          %s692 = scalar_select %p691, %s28, 1
          %s693 = smul.addr %s692, 8
          %s694 = scalar_lea.vmem %s7, %s693
        $region76: #{tpu_custom_call.1} parent=71 // pred_fallthru
          _
      $region72: #{tpu_custom_call.1} parent=5 // pred_fallthru
        _
    $region6: #{tpu_custom_call.1} parent=1 // loop_footer
      %s21 = sadd.s32 1, %s17
    $region7: #{tpu_custom_call.1} parent=1 // loop_footer_branch
      %16 = sbr.rel target = $region3
    $region8: #{tpu_custom_call.1} parent=1 // loop_exit
      _
    %695 = vsyncpa [#allocation4], 1
    %s696 = scalar_lea.sflag [#allocation4], 1
    %697 = vsyncpa %s696, 1
    %698 = vsyncpa [#allocation6], 1

</llo_original>
